<compile_context>
chip_gen: v7x
topology: tpu7x:2x2x1
jax: 0.10.0
libtpu: 0.0.40
codegen_flags: <defaults>
</compile_context>

<pallas_src>
import jax
import jax.numpy as jnp
from jax.experimental import pallas as pl
from jax.experimental.pallas import tpu as pltpu

TRANS_VEC_DIM = {'raw_absolute': 24, 'aligned_absolute': 18, 'aligned_relative': 12}

PAD = 128          # lane-dense padded width for every fused layer
NUM_LAYERS = 5     # block-diag L1, L2, L3, fused model_end L1, model_end L2


# ---------------------------------------------------------------------------
# Pallas kernel: 5 fused (N,128)@(128,128) matmuls, bias + ReLU in between.
# ---------------------------------------------------------------------------
def simple_trans_kernel(x_ref, w_ref, b_ref, out_ref):
    h = x_ref[...]                                   # (N, 128)
    # layers 0..3: Linear(+folded BN) + ReLU
    for i in range(NUM_LAYERS - 1):
        h = jnp.maximum(
            jnp.dot(h, w_ref[i], preferred_element_type=jnp.float32) + b_ref[i],
            0.0)
    # final layer: plain Linear (predicate logits, padded to 128 lanes)
    out_ref[...] = (
        jnp.dot(h, w_ref[NUM_LAYERS - 1], preferred_element_type=jnp.float32)
        + b_ref[NUM_LAYERS - 1])


# ---------------------------------------------------------------------------
# Parameter construction (deterministic) + BN folding
# ---------------------------------------------------------------------------
def _fold_bn(w, b, gamma, beta, mean, var, eps=1e-5):
    """Fold eval-mode BatchNorm1d into the preceding Linear (w: (in, out))."""
    scale = gamma / jnp.sqrt(var + eps)
    w_f = w * scale[None, :]
    b_f = (b - mean) * scale + beta
    return w_f.astype(jnp.float32), b_f.reshape(1, -1).astype(jnp.float32)


def _linear_bn_params(key, fan_in, fan_out):
    kw, kb, kg, kbe, km, kv = jax.random.split(key, 6)
    w = jax.random.normal(kw, (fan_in, fan_out), jnp.float32) * 0.1
    b = jax.random.normal(kb, (fan_out,), jnp.float32) * 0.05
    gamma = 1.0 + 0.1 * jax.random.normal(kg, (fan_out,), jnp.float32)
    beta = 0.1 * jax.random.normal(kbe, (fan_out,), jnp.float32)
    mean = 0.1 * jax.random.normal(km, (fan_out,), jnp.float32)
    var = 1.0 + 0.05 * jnp.abs(jax.random.normal(kv, (fan_out,), jnp.float32))
    return _fold_bn(w, b, gamma, beta, mean, var)


def _plain_linear_params(key, fan_in, fan_out):
    kw, kb = jax.random.split(key, 2)
    w = jax.random.normal(kw, (fan_in, fan_out), jnp.float32) * 0.1
    b = jax.random.normal(kb, (fan_out,), jnp.float32) * 0.05
    return w, b.reshape(1, -1)


def make_params(key, inp_size, feat_dim, predicate_dim, object_dim):
    keys = jax.random.split(key, 12)
    p = {}
    # model_tv: 3 x (Linear + BN + ReLU)
    p['tv1'] = _linear_bn_params(keys[0], inp_size, feat_dim)
    p['tv2'] = _linear_bn_params(keys[1], feat_dim, feat_dim)
    p['tv3'] = _linear_bn_params(keys[2], feat_dim, feat_dim)
    # model_subj
    p['s1'] = _linear_bn_params(keys[3], object_dim, feat_dim)
    p['s2'] = _linear_bn_params(keys[4], feat_dim, feat_dim)
    p['s3'] = _linear_bn_params(keys[5], feat_dim, feat_dim)
    # model_obj
    p['o1'] = _linear_bn_params(keys[6], object_dim, feat_dim)
    p['o2'] = _linear_bn_params(keys[7], feat_dim, feat_dim)
    p['o3'] = _linear_bn_params(keys[8], feat_dim, feat_dim)
    # model_end: Linear+BN+ReLU, then plain Linear(feat_dim, predicate_dim)
    p['e1'] = _linear_bn_params(keys[9], feat_dim, feat_dim)
    p['e2'] = _plain_linear_params(keys[10], feat_dim, predicate_dim)
    return p


# ---------------------------------------------------------------------------
# Host-side packing: 23 tensors -> one weight slab + one bias slab.
# ---------------------------------------------------------------------------
def pack_params(params, inp_size, feat_dim, predicate_dim, object_dim, pad=PAD):
    f = feat_dim
    W = jnp.zeros((NUM_LAYERS, pad, pad), jnp.float32)
    B = jnp.zeros((NUM_LAYERS, 1, pad), jnp.float32)

    # Layer 0: block-diag over (tv, subj, obj) first layers.
    #   input cols:  [0:inp_size] x_tv, [inp_size:+object_dim] subj one-hot,
    #                [inp_size+object_dim:+object_dim] obj one-hot
    #   output cols: [0:f] tv, [f:2f] subj, [2f:3f] obj
    wtv1, btv1 = params['tv1']
    ws1, bs1 = params['s1']
    wo1, bo1 = params['o1']
    W = W.at[0, 0:inp_size, 0:f].set(wtv1)
    W = W.at[0, inp_size:inp_size + object_dim, f:2 * f].set(ws1)
    W = W.at[0, inp_size + object_dim:inp_size + 2 * object_dim, 2 * f:3 * f].set(wo1)
    B = B.at[0, 0, 0:f].set(btv1[0])
    B = B.at[0, 0, f:2 * f].set(bs1[0])
    B = B.at[0, 0, 2 * f:3 * f].set(bo1[0])

    # Layers 1, 2: block-diagonal second/third layers of the three branches.
    for li, keys3 in enumerate((('tv2', 's2', 'o2'), ('tv3', 's3', 'o3')), start=1):
        for bi, k in enumerate(keys3):
            w, b = params[k]
            W = W.at[li, bi * f:(bi + 1) * f, bi * f:(bi + 1) * f].set(w)
            B = B.at[li, 0, bi * f:(bi + 1) * f].set(b[0])

    # Layer 3: model_end first Linear+BN+ReLU, with the branch sum
    # (feat_tv + feat_subj + feat_obj) folded in by stacking we1 vertically.
    we1, be1 = params['e1']
    for bi in range(3):
        W = W.at[3, bi * f:(bi + 1) * f, 0:f].set(we1)
    B = B.at[3, 0, 0:f].set(be1[0])

    # Layer 4: final Linear(feat_dim -> predicate_dim), padded to 128 lanes.
    we2, be2 = params['e2']
    W = W.at[4, 0:f, 0:predicate_dim].set(we2)
    B = B.at[4, 0, 0:predicate_dim].set(be2[0])
    return W, B


# ---------------------------------------------------------------------------
# Wrapper
# ---------------------------------------------------------------------------
def simple_trans_forward(w_slab, b_slab, feat_dict, predi, trans_vec,
                         predicate_dim, object_dim, inp_size, pad=PAD):
    # Glue: concat transform vectors + one-hots, packed into ONE lane-dense
    # (N, 128) activation array (single input DMA).
    x_tv = jnp.concatenate([feat_dict[name] for name in trans_vec],
                           axis=1).astype(jnp.float32)
    x_subj = jax.nn.one_hot(feat_dict['subj'], object_dim, dtype=jnp.float32)
    x_obj = jax.nn.one_hot(feat_dict['obj'], object_dim, dtype=jnp.float32)
    x_packed = jnp.concatenate([x_tv, x_subj, x_obj], axis=1)
    n, used = x_packed.shape
    assert used == inp_size + 2 * object_dim
    x_packed = jnp.pad(x_packed, ((0, 0), (0, pad - used)))

    vmem = pl.BlockSpec(memory_space=pltpu.MemorySpace.VMEM)
    feat_pad = pl.pallas_call(
        simple_trans_kernel,
        out_shape=jax.ShapeDtypeStruct((n, pad), jnp.float32),
        in_specs=[vmem, vmem, vmem],
        out_specs=vmem,
    )(x_packed, w_slab, b_slab)

    # torch.sum(feat * one_hot(predi), 1)  ==  feat[i, predi[i]]
    return feat_pad[jnp.arange(n), predi]


# Pure-JAX reference (unfused, same folded params) — validates both the math
# and the block-diagonal / slab packing.
def simple_trans_reference(params, feat_dict, predi, trans_vec,
                           predicate_dim, object_dim):
    def mlp3(x, a, b, c):
        h = jnp.maximum(x @ a[0] + a[1], 0.0)
        h = jnp.maximum(h @ b[0] + b[1], 0.0)
        h = jnp.maximum(h @ c[0] + c[1], 0.0)
        return h

    x_tv = jnp.concatenate([feat_dict[name] for name in trans_vec], 1).astype(jnp.float32)
    x_subj = jax.nn.one_hot(feat_dict['subj'], object_dim, dtype=jnp.float32)
    x_obj = jax.nn.one_hot(feat_dict['obj'], object_dim, dtype=jnp.float32)
    p_onehot = jax.nn.one_hot(predi, predicate_dim, dtype=jnp.float32)

    f_tv = mlp3(x_tv, params['tv1'], params['tv2'], params['tv3'])
    f_s = mlp3(x_subj, params['s1'], params['s2'], params['s3'])
    f_o = mlp3(x_obj, params['o1'], params['o2'], params['o3'])
    fused = f_tv + f_s + f_o
    h = jnp.maximum(fused @ params['e1'][0] + params['e1'][1], 0.0)
    feat = h @ params['e2'][0] + params['e2'][1]
    return jnp.sum(feat * p_onehot, axis=1)


# ---------------------------------------------------------------------------
if __name__ == "__main__":
    trans_vec = ['raw_absolute', 'aligned_relative']
    feat_dim = 32
    predicate_dim = 16
    object_dim = 10
    N = 8
    inp_size = sum(TRANS_VEC_DIM[t] for t in trans_vec)  # 36

    key = jax.random.PRNGKey(0)
    k_param, k_ra, k_ar, k_subj, k_obj, k_pred = jax.random.split(key, 6)

    params = make_params(k_param, inp_size, feat_dim, predicate_dim, object_dim)
    w_slab, b_slab = pack_params(params, inp_size, feat_dim,
                                 predicate_dim, object_dim)

    feat_dict = {
        'raw_absolute': jax.random.normal(k_ra, (N, TRANS_VEC_DIM['raw_absolute']),
                                          jnp.float32),
        'aligned_relative': jax.random.normal(k_ar, (N, TRANS_VEC_DIM['aligned_relative']),
                                              jnp.float32),
        'subj': jax.random.randint(k_subj, (N,), 0, object_dim, jnp.int32),
        'obj': jax.random.randint(k_obj, (N,), 0, object_dim, jnp.int32),
    }
    predi = jax.random.randint(k_pred, (N,), 0, predicate_dim, jnp.int32)

    out = simple_trans_forward(w_slab, b_slab, feat_dict, predi, trans_vec,
                               predicate_dim, object_dim, inp_size)
    out = jax.block_until_ready(out)

    ref = simple_trans_reference(params, feat_dict, predi, trans_vec,
                                 predicate_dim, object_dim)
    assert out.shape == (N,)
    assert jnp.allclose(out, ref, rtol=1e-3, atol=1e-3), (out, ref)

    print("KERNEL_OK")
</pallas_src>

<mosaic_0001>
module attributes {stable_mosaic.version = 11 : i64} {
  func.func @simple_trans_kernel(%arg0: memref<8x128xf32, #tpu.memory_space<vmem>>, %arg1: memref<5x128x128xf32, #tpu.memory_space<vmem>>, %arg2: memref<5x1x128xf32, #tpu.memory_space<vmem>>, %arg3: memref<8x128xf32, #tpu.memory_space<vmem>>) attributes {dimension_semantics = [], scalar_prefetch = 0 : i64, scratch_operands = 0 : i64, tpu.core_type = #tpu.core_type<tc>} {
    %c0 = arith.constant 0 : index
    %c0_0 = arith.constant 0 : index
    %0 = vector.load %arg0[%c0, %c0_0] : memref<8x128xf32, #tpu.memory_space<vmem>>, vector<8x128xf32>
    %c0_1 = arith.constant 0 : index
    %c0_2 = arith.constant 0 : index
    %c0_3 = arith.constant 0 : index
    %1 = vector.load %arg1[%c0_1, %c0_2, %c0_3] : memref<5x128x128xf32, #tpu.memory_space<vmem>>, vector<1x128x128xf32>
    %2 = vector.shape_cast %1 : vector<1x128x128xf32> to vector<128x128xf32>
    %cst = arith.constant dense<0.000000e+00> : vector<8x128xf32>
    %3 = tpu.matmul %0, %2, %cst {dimension_numbers = #tpu.dot_dimension_numbers<[1], [0], [0], [1], [0, 0, 1, 1], [], []>} : vector<8x128xf32>, vector<128x128xf32>, vector<8x128xf32> -> vector<8x128xf32>
    %c0_4 = arith.constant 0 : index
    %c0_5 = arith.constant 0 : index
    %c0_6 = arith.constant 0 : index
    %4 = vector.load %arg2[%c0_4, %c0_5, %c0_6] : memref<5x1x128xf32, #tpu.memory_space<vmem>>, vector<1x1x128xf32>
    %5 = vector.shape_cast %4 : vector<1x1x128xf32> to vector<1x128xf32>
    %6 = vector.broadcast %5 : vector<1x128xf32> to vector<8x128xf32>
    %7 = arith.addf %3, %6 : vector<8x128xf32>
    %cst_7 = arith.constant 0.000000e+00 : f32
    %8 = vector.broadcast %cst_7 : f32 to vector<8x128xf32>
    %9 = arith.maximumf %7, %8 : vector<8x128xf32>
    %c1 = arith.constant 1 : index
    %c0_8 = arith.constant 0 : index
    %c0_9 = arith.constant 0 : index
    %10 = vector.load %arg1[%c1, %c0_8, %c0_9] : memref<5x128x128xf32, #tpu.memory_space<vmem>>, vector<1x128x128xf32>
    %11 = vector.shape_cast %10 : vector<1x128x128xf32> to vector<128x128xf32>
    %cst_10 = arith.constant dense<0.000000e+00> : vector<8x128xf32>
    %12 = tpu.matmul %9, %11, %cst_10 {dimension_numbers = #tpu.dot_dimension_numbers<[1], [0], [0], [1], [0, 0, 1, 1], [], []>} : vector<8x128xf32>, vector<128x128xf32>, vector<8x128xf32> -> vector<8x128xf32>
    %c1_11 = arith.constant 1 : index
    %c0_12 = arith.constant 0 : index
    %c0_13 = arith.constant 0 : index
    %13 = vector.load %arg2[%c1_11, %c0_12, %c0_13] : memref<5x1x128xf32, #tpu.memory_space<vmem>>, vector<1x1x128xf32>
    %14 = vector.shape_cast %13 : vector<1x1x128xf32> to vector<1x128xf32>
    %15 = vector.broadcast %14 : vector<1x128xf32> to vector<8x128xf32>
    %16 = arith.addf %12, %15 : vector<8x128xf32>
    %cst_14 = arith.constant 0.000000e+00 : f32
    %17 = vector.broadcast %cst_14 : f32 to vector<8x128xf32>
    %18 = arith.maximumf %16, %17 : vector<8x128xf32>
    %c2 = arith.constant 2 : index
    %c0_15 = arith.constant 0 : index
    %c0_16 = arith.constant 0 : index
    %19 = vector.load %arg1[%c2, %c0_15, %c0_16] : memref<5x128x128xf32, #tpu.memory_space<vmem>>, vector<1x128x128xf32>
    %20 = vector.shape_cast %19 : vector<1x128x128xf32> to vector<128x128xf32>
    %cst_17 = arith.constant dense<0.000000e+00> : vector<8x128xf32>
    %21 = tpu.matmul %18, %20, %cst_17 {dimension_numbers = #tpu.dot_dimension_numbers<[1], [0], [0], [1], [0, 0, 1, 1], [], []>} : vector<8x128xf32>, vector<128x128xf32>, vector<8x128xf32> -> vector<8x128xf32>
    %c2_18 = arith.constant 2 : index
    %c0_19 = arith.constant 0 : index
    %c0_20 = arith.constant 0 : index
    %22 = vector.load %arg2[%c2_18, %c0_19, %c0_20] : memref<5x1x128xf32, #tpu.memory_space<vmem>>, vector<1x1x128xf32>
    %23 = vector.shape_cast %22 : vector<1x1x128xf32> to vector<1x128xf32>
    %24 = vector.broadcast %23 : vector<1x128xf32> to vector<8x128xf32>
    %25 = arith.addf %21, %24 : vector<8x128xf32>
    %cst_21 = arith.constant 0.000000e+00 : f32
    %26 = vector.broadcast %cst_21 : f32 to vector<8x128xf32>
    %27 = arith.maximumf %25, %26 : vector<8x128xf32>
    %c3 = arith.constant 3 : index
    %c0_22 = arith.constant 0 : index
    %c0_23 = arith.constant 0 : index
    %28 = vector.load %arg1[%c3, %c0_22, %c0_23] : memref<5x128x128xf32, #tpu.memory_space<vmem>>, vector<1x128x128xf32>
    %29 = vector.shape_cast %28 : vector<1x128x128xf32> to vector<128x128xf32>
    %cst_24 = arith.constant dense<0.000000e+00> : vector<8x128xf32>
    %30 = tpu.matmul %27, %29, %cst_24 {dimension_numbers = #tpu.dot_dimension_numbers<[1], [0], [0], [1], [0, 0, 1, 1], [], []>} : vector<8x128xf32>, vector<128x128xf32>, vector<8x128xf32> -> vector<8x128xf32>
    %c3_25 = arith.constant 3 : index
    %c0_26 = arith.constant 0 : index
    %c0_27 = arith.constant 0 : index
    %31 = vector.load %arg2[%c3_25, %c0_26, %c0_27] : memref<5x1x128xf32, #tpu.memory_space<vmem>>, vector<1x1x128xf32>
    %32 = vector.shape_cast %31 : vector<1x1x128xf32> to vector<1x128xf32>
    %33 = vector.broadcast %32 : vector<1x128xf32> to vector<8x128xf32>
    %34 = arith.addf %30, %33 : vector<8x128xf32>
    %cst_28 = arith.constant 0.000000e+00 : f32
    %35 = vector.broadcast %cst_28 : f32 to vector<8x128xf32>
    %36 = arith.maximumf %34, %35 : vector<8x128xf32>
    %c4 = arith.constant 4 : index
    %c0_29 = arith.constant 0 : index
    %c0_30 = arith.constant 0 : index
    %37 = vector.load %arg1[%c4, %c0_29, %c0_30] : memref<5x128x128xf32, #tpu.memory_space<vmem>>, vector<1x128x128xf32>
    %38 = vector.shape_cast %37 : vector<1x128x128xf32> to vector<128x128xf32>
    %cst_31 = arith.constant dense<0.000000e+00> : vector<8x128xf32>
    %39 = tpu.matmul %36, %38, %cst_31 {dimension_numbers = #tpu.dot_dimension_numbers<[1], [0], [0], [1], [0, 0, 1, 1], [], []>} : vector<8x128xf32>, vector<128x128xf32>, vector<8x128xf32> -> vector<8x128xf32>
    %c4_32 = arith.constant 4 : index
    %c0_33 = arith.constant 0 : index
    %c0_34 = arith.constant 0 : index
    %40 = vector.load %arg2[%c4_32, %c0_33, %c0_34] : memref<5x1x128xf32, #tpu.memory_space<vmem>>, vector<1x1x128xf32>
    %41 = vector.shape_cast %40 : vector<1x1x128xf32> to vector<1x128xf32>
    %42 = vector.broadcast %41 : vector<1x128xf32> to vector<8x128xf32>
    %43 = arith.addf %39, %42 : vector<8x128xf32>
    %c0_35 = arith.constant 0 : index
    %c0_36 = arith.constant 0 : index
    %44 = vector.load %arg3[%c0_35, %c0_36] : memref<8x128xf32, #tpu.memory_space<vmem>>, vector<8x128xf32>
    tpu.vector_store %arg3[%c0_35, %c0_36], %43 {strides = array<i32>} : memref<8x128xf32, #tpu.memory_space<vmem>>, vector<8x128xf32>,
    return
  }
}

</mosaic_0001>

<llo_original>
// kernel: tpu_custom_call.1
$region0: #{tpu_custom_call.1}
  #allocation0 [shape = 'u32[]', space=smem, size = 0x4, offset = 0x4, fixed_abs, tag = 'smem constant byte address 0x4 - core index']
  #allocation1 [shape = 'u32[144,128]{1,0:T(1,128)}', space=vmem, size = 0x12000, scoped, tag = 'internal scratch']
  %s0 = inlined_call_operand.hbm [shape: f32[8,128], index: 0, kind: input, shape index: {}]
  %s1 = inlined_call_operand.hbm [shape: f32[5,128,128], index: 1, kind: input, shape index: {}]
  %s2 = inlined_call_operand.vmem [shape: f32[5,1,128], index: 2, kind: input, shape index: {}]
  %s3 = inlined_call_operand.hbm [shape: f32[8,128], index: 3, kind: output, shape index: {}]
  %s4 = sld [smem:[#allocation0]]
  $region30: #{tpu_custom_call.1} parent=0
    _
  %s6 = ssub.s32 1, %s4
  %s7 = scalar_select 0, %s6, %s4
  $region1: #{tpu_custom_call.1} parent=0
    #allocation2 [shape = 'u8[4096]{0}', space=vmem, size = 0x1000, scoped, tag = 'input window, operand 0, single buffered']
    #allocation3 [shape = 's32[1]{0}', space=sflag, size = 0x4, scoped, tag = 'scoped memory for tpu_custom_call.1']
    #allocation4 [shape = 's32[1]{0}', space=sflag, size = 0x4, scoped, tag = 'scoped memory for tpu_custom_call.1']
    #allocation5 [shape = 'u8[327680]{0}', space=vmem, size = 0x50000, scoped, tag = 'input window, operand 1, single buffered']
    #allocation6 [shape = 's32[1]{0}', space=sflag, size = 0x4, scoped, tag = 'scoped memory for tpu_custom_call.1']
    #allocation7 [shape = 'u8[4096]{0}', space=vmem, size = 0x1000, scoped, tag = 'output window, operand 0, single buffered']
    %8 = vsyncpa [#allocation3], 0
    %9 = vsyncpa [#allocation6], 0
    %10 = vsyncpa [#allocation4], 0
    // Predicated region
    $region2: #{tpu_custom_call.1} parent=1 // pred_check
      _
    $region3: #{tpu_custom_call.1} parent=1 // pred_check_branch
      %12 = sbr.rel (0) target = $region5
    $region4: #{tpu_custom_call.1} parent=1 // pred_region
      %s14 = ssub.s32 128, 128
      %15 = vsyncadd [#allocation3], %s14
      %s17 = sshll.u32 [#allocation2], 4
      %s18 = int_to_ptr.vmem [resolvable:$true] %s17
      %20 = dma.hbm_to_vmem [thread:$0]  %s0, 128, %s18, [#allocation3]
    $region5: #{tpu_custom_call.1} parent=1 // pred_fallthru
      _
    // Predicated region
    $region6: #{tpu_custom_call.1} parent=1 // pred_check
      _
    $region7: #{tpu_custom_call.1} parent=1 // pred_check_branch
      %22 = sbr.rel (0) target = $region9
    $region8: #{tpu_custom_call.1} parent=1 // pred_region
      %s24 = ssub.s32 10240, 10240
      %25 = vsyncadd [#allocation6], %s24
      %s26 = sshll.u32 [#allocation5], 4
      %s27 = int_to_ptr.vmem [resolvable:$true] %s26
      %32 = dma.hbm_to_vmem [thread:$0]  %s1, 10240, %s27, [#allocation6], 128, 128, 8
    $region9: #{tpu_custom_call.1} parent=1 // pred_fallthru
      _
    // Predicated region
    $region10: #{tpu_custom_call.1} parent=1 // pred_check
      _
    $region11: #{tpu_custom_call.1} parent=1 // pred_check_branch
      %34 = sbr.rel (0) target = $region13
    $region12: #{tpu_custom_call.1} parent=1 // pred_region
      _
    $region13: #{tpu_custom_call.1} parent=1 // pred_fallthru
      _
    // Predicated region
    $region14: #{tpu_custom_call.1} parent=1 // pred_check
      _
    $region15: #{tpu_custom_call.1} parent=1 // pred_check_branch
      %36 = sbr.rel (0) target = $region17
    $region16: #{tpu_custom_call.1} parent=1 // pred_region
      %37 = dma.done [#allocation3], 128
    $region17: #{tpu_custom_call.1} parent=1 // pred_fallthru
      _
    // Predicated region
    $region18: #{tpu_custom_call.1} parent=1 // pred_check
      _
    $region19: #{tpu_custom_call.1} parent=1 // pred_check_branch
      %39 = sbr.rel (0) target = $region21
    $region20: #{tpu_custom_call.1} parent=1 // pred_region
      %40 = dma.done [#allocation6], 10240
    $region21: #{tpu_custom_call.1} parent=1 // pred_fallthru
      _
    %v41 = vld [vmem:[#allocation2] sm:$0xff]
    %v42 = vld [vmem:[#allocation5] sm:$0xff]
    %v43 = vld [vmem:[#allocation5 + $0x8] sm:$0xff]
    %v44 = vld [vmem:[#allocation5 + $0x10] sm:$0xff]
    %v45 = vld [vmem:[#allocation5 + $0x18] sm:$0xff]
    %v46 = vld [vmem:[#allocation5 + $0x20] sm:$0xff]
    %v47 = vld [vmem:[#allocation5 + $0x28] sm:$0xff]
    %v48 = vld [vmem:[#allocation5 + $0x30] sm:$0xff]
    %v49 = vld [vmem:[#allocation5 + $0x38] sm:$0xff]
    %v50 = vld [vmem:[#allocation5 + $0x40] sm:$0xff]
    %v51 = vld [vmem:[#allocation5 + $0x48] sm:$0xff]
    %v52 = vld [vmem:[#allocation5 + $0x50] sm:$0xff]
    %v53 = vld [vmem:[#allocation5 + $0x58] sm:$0xff]
    %v54 = vld [vmem:[#allocation5 + $0x60] sm:$0xff]
    %v55 = vld [vmem:[#allocation5 + $0x68] sm:$0xff]
    %v56 = vld [vmem:[#allocation5 + $0x70] sm:$0xff]
    %v57 = vld [vmem:[#allocation5 + $0x78] sm:$0xff]
    %v58 = vld [vmem:[%s2] sm:$0x1]
    %v60 = vlaneseq
    %v61 = vshrl.u32 %v60, 7
    %v62 = vsub.s32 0, %v61
    %v63 = vrot.slane %v58, %v62
    %65 = vmatprep.subr.mxu0 0.0
    %66 = vmatpush1.msra.mxu0 %v42
    %67 = vmatprep.subr.mxu0 0.0
    %68 = vmatpush1.msra.mxu0 %v43
    %69 = vmatprep.subr.mxu0 0.0
    %70 = vmatpush1.msra.mxu0 %v44
    %71 = vmatprep.subr.mxu0 0.0
    %72 = vmatpush1.msra.mxu0 %v45
    %73 = vmatprep.subr.mxu0 0.0
    %74 = vmatpush1.msra.mxu0 %v46
    %75 = vmatprep.subr.mxu0 0.0
    %76 = vmatpush1.msra.mxu0 %v47
    %77 = vmatprep.subr.mxu0 0.0
    %78 = vmatpush1.msra.mxu0 %v48
    %79 = vmatprep.subr.mxu0 0.0
    %80 = vmatpush1.msra.mxu0 %v49
    %81 = vmatprep.subr.mxu0 0.0
    %82 = vmatpush1.msra.mxu0 %v50
    %83 = vmatprep.subr.mxu0 0.0
    %84 = vmatpush1.msra.mxu0 %v51
    %85 = vmatprep.subr.mxu0 0.0
    %86 = vmatpush1.msra.mxu0 %v52
    %87 = vmatprep.subr.mxu0 0.0
    %88 = vmatpush1.msra.mxu0 %v53
    %89 = vmatprep.subr.mxu0 0.0
    %90 = vmatpush1.msra.mxu0 %v54
    %91 = vmatprep.subr.mxu0 0.0
    %92 = vmatpush1.msra.mxu0 %v55
    %93 = vmatprep.subr.mxu0 0.0
    %94 = vmatpush1.msra.mxu0 %v56
    %95 = vmatprep.subr.mxu0 0.0
    %96 = vmatpush1.msra.mxu0 %v57
    %97 = vmatprep.subr.mxu0 0.0
    %98 = vmatpush1.msra.mxu0 0.0
    %99 = vmatprep.subr.mxu0 0.0
    %100 = vmatpush1.msra.mxu0 0.0
    %101 = vmatprep.subr.mxu0 0.0
    %102 = vmatpush1.msra.mxu0 0.0
    %103 = vmatprep.subr.mxu0 0.0
    %104 = vmatpush1.msra.mxu0 0.0
    %105 = vmatprep.subr.mxu0 0.0
    %106 = vmatpush1.msra.mxu0 0.0
    %107 = vmatprep.subr.mxu0 0.0
    %108 = vmatpush1.msra.mxu0 0.0
    %109 = vmatprep.subr.mxu0 0.0
    %110 = vmatpush1.msra.mxu0 0.0
    %111 = vmatprep.subr.mxu0 0.0
    %112 = vmatpush1.msra.mxu0 0.0
    %113 = vmatprep.subr.mxu0 0.0
    %114 = vmatpush1.msra.mxu0 0.0
    %115 = vmatprep.subr.mxu0 0.0
    %116 = vmatpush1.msra.mxu0 0.0
    %117 = vmatprep.subr.mxu0 0.0
    %118 = vmatpush1.msra.mxu0 0.0
    %119 = vmatprep.subr.mxu0 0.0
    %120 = vmatpush1.msra.mxu0 0.0
    %121 = vmatprep.subr.mxu0 0.0
    %122 = vmatpush1.msra.mxu0 0.0
    %123 = vmatprep.subr.mxu0 0.0
    %124 = vmatpush1.msra.mxu0 0.0
    %125 = vmatprep.subr.mxu0 0.0
    %126 = vmatpush1.msra.mxu0 0.0
    %127 = vmatprep.subr.mxu0 0.0
    %128 = vmatpush1.msra.mxu0 0.0
    %129 = vmatprep.mubr.f32.mxu0 0.0
    %130 = vmatmul.mubr.f32.gmra.mrb[0].mxu0 %v41
    %v131 = vpop.f32.mrb[0].mxu0
    %v132 = vadd.f32 %v63, %v131
    %v133 = vpop.f32.mrb[0].mxu0
    %134 = vdwg.mxu0
    %v135 = vmax.f32 %v132, 0.0
    %s136 = scalar_lea.vmem [#allocation5], 128
    %v137 = vld [vmem:[%s136] sm:$0xff]
    %v138 = vld [vmem:[%s136 + $0x8] sm:$0xff]
    %v139 = vld [vmem:[%s136 + $0x10] sm:$0xff]
    %v140 = vld [vmem:[%s136 + $0x18] sm:$0xff]
    %v141 = vld [vmem:[%s136 + $0x20] sm:$0xff]
    %v142 = vld [vmem:[%s136 + $0x28] sm:$0xff]
    %v143 = vld [vmem:[%s136 + $0x30] sm:$0xff]
    %v144 = vld [vmem:[%s136 + $0x38] sm:$0xff]
    %v145 = vld [vmem:[%s136 + $0x40] sm:$0xff]
    %v146 = vld [vmem:[%s136 + $0x48] sm:$0xff]
    %v147 = vld [vmem:[%s136 + $0x50] sm:$0xff]
    %v148 = vld [vmem:[%s136 + $0x58] sm:$0xff]
    %v149 = vld [vmem:[%s136 + $0x60] sm:$0xff]
    %v150 = vld [vmem:[%s136 + $0x68] sm:$0xff]
    %v151 = vld [vmem:[%s136 + $0x70] sm:$0xff]
    %v152 = vld [vmem:[%s136 + $0x78] sm:$0xff]
    %s153 = scalar_lea.vmem %s2, 1
    %v154 = vld [vmem:[%s153] sm:$0x1]
    %v156 = vlaneseq
    %v157 = vshrl.u32 %v156, 7
    %v158 = vsub.s32 0, %v157
    %v159 = vrot.slane %v154, %v158
    %161 = vmatprep.subr.mxu0 0.0
    %162 = vmatpush1.msra.mxu0 %v137
    %163 = vmatprep.subr.mxu0 0.0
    %164 = vmatpush1.msra.mxu0 %v138
    %165 = vmatprep.subr.mxu0 0.0
    %166 = vmatpush1.msra.mxu0 %v139
    %167 = vmatprep.subr.mxu0 0.0
    %168 = vmatpush1.msra.mxu0 %v140
    %169 = vmatprep.subr.mxu0 0.0
    %170 = vmatpush1.msra.mxu0 %v141
    %171 = vmatprep.subr.mxu0 0.0
    %172 = vmatpush1.msra.mxu0 %v142
    %173 = vmatprep.subr.mxu0 0.0
    %174 = vmatpush1.msra.mxu0 %v143
    %175 = vmatprep.subr.mxu0 0.0
    %176 = vmatpush1.msra.mxu0 %v144
    %177 = vmatprep.subr.mxu0 0.0
    %178 = vmatpush1.msra.mxu0 %v145
    %179 = vmatprep.subr.mxu0 0.0
    %180 = vmatpush1.msra.mxu0 %v146
    %181 = vmatprep.subr.mxu0 0.0
    %182 = vmatpush1.msra.mxu0 %v147
    %183 = vmatprep.subr.mxu0 0.0
    %184 = vmatpush1.msra.mxu0 %v148
    %185 = vmatprep.subr.mxu0 0.0
    %186 = vmatpush1.msra.mxu0 %v149
    %187 = vmatprep.subr.mxu0 0.0
    %188 = vmatpush1.msra.mxu0 %v150
    %189 = vmatprep.subr.mxu0 0.0
    %190 = vmatpush1.msra.mxu0 %v151
    %191 = vmatprep.subr.mxu0 0.0
    %192 = vmatpush1.msra.mxu0 %v152
    %193 = vmatprep.subr.mxu0 0.0
    %194 = vmatpush1.msra.mxu0 0.0
    %195 = vmatprep.subr.mxu0 0.0
    %196 = vmatpush1.msra.mxu0 0.0
    %197 = vmatprep.subr.mxu0 0.0
    %198 = vmatpush1.msra.mxu0 0.0
    %199 = vmatprep.subr.mxu0 0.0
    %200 = vmatpush1.msra.mxu0 0.0
    %201 = vmatprep.subr.mxu0 0.0
    %202 = vmatpush1.msra.mxu0 0.0
    %203 = vmatprep.subr.mxu0 0.0
    %204 = vmatpush1.msra.mxu0 0.0
    %205 = vmatprep.subr.mxu0 0.0
    %206 = vmatpush1.msra.mxu0 0.0
    %207 = vmatprep.subr.mxu0 0.0
    %208 = vmatpush1.msra.mxu0 0.0
    %209 = vmatprep.subr.mxu0 0.0
    %210 = vmatpush1.msra.mxu0 0.0
    %211 = vmatprep.subr.mxu0 0.0
    %212 = vmatpush1.msra.mxu0 0.0
    %213 = vmatprep.subr.mxu0 0.0
    %214 = vmatpush1.msra.mxu0 0.0
    %215 = vmatprep.subr.mxu0 0.0
    %216 = vmatpush1.msra.mxu0 0.0
    %217 = vmatprep.subr.mxu0 0.0
    %218 = vmatpush1.msra.mxu0 0.0
    %219 = vmatprep.subr.mxu0 0.0
    %220 = vmatpush1.msra.mxu0 0.0
    %221 = vmatprep.subr.mxu0 0.0
    %222 = vmatpush1.msra.mxu0 0.0
    %223 = vmatprep.subr.mxu0 0.0
    %224 = vmatpush1.msra.mxu0 0.0
    %225 = vmatprep.mubr.f32.mxu0 0.0
    %226 = vmatmul.mubr.f32.gmra.mrb[0].mxu0 %v135
    %v227 = vpop.f32.mrb[0].mxu0
    %v228 = vadd.f32 %v159, %v227
    %v229 = vpop.f32.mrb[0].mxu0
    %230 = vdwg.mxu0
    %v231 = vmax.f32 %v228, 0.0
    %s232 = scalar_lea.vmem [#allocation5], 256
    %v233 = vld [vmem:[%s232] sm:$0xff]
    %v234 = vld [vmem:[%s232 + $0x8] sm:$0xff]
    %v235 = vld [vmem:[%s232 + $0x10] sm:$0xff]
    %v236 = vld [vmem:[%s232 + $0x18] sm:$0xff]
    %v237 = vld [vmem:[%s232 + $0x20] sm:$0xff]
    %v238 = vld [vmem:[%s232 + $0x28] sm:$0xff]
    %v239 = vld [vmem:[%s232 + $0x30] sm:$0xff]
    %v240 = vld [vmem:[%s232 + $0x38] sm:$0xff]
    %v241 = vld [vmem:[%s232 + $0x40] sm:$0xff]
    %v242 = vld [vmem:[%s232 + $0x48] sm:$0xff]
    %v243 = vld [vmem:[%s232 + $0x50] sm:$0xff]
    %v244 = vld [vmem:[%s232 + $0x58] sm:$0xff]
    %v245 = vld [vmem:[%s232 + $0x60] sm:$0xff]
    %v246 = vld [vmem:[%s232 + $0x68] sm:$0xff]
    %v247 = vld [vmem:[%s232 + $0x70] sm:$0xff]
    %v248 = vld [vmem:[%s232 + $0x78] sm:$0xff]
    %s249 = scalar_lea.vmem %s2, 2
    %v250 = vld [vmem:[%s249] sm:$0x1]
    %v252 = vlaneseq
    %v253 = vshrl.u32 %v252, 7
    %v254 = vsub.s32 0, %v253
    %v255 = vrot.slane %v250, %v254
    %257 = vmatprep.subr.mxu0 0.0
    %258 = vmatpush1.msra.mxu0 %v233
    %259 = vmatprep.subr.mxu0 0.0
    %260 = vmatpush1.msra.mxu0 %v234
    %261 = vmatprep.subr.mxu0 0.0
    %262 = vmatpush1.msra.mxu0 %v235
    %263 = vmatprep.subr.mxu0 0.0
    %264 = vmatpush1.msra.mxu0 %v236
    %265 = vmatprep.subr.mxu0 0.0
    %266 = vmatpush1.msra.mxu0 %v237
    %267 = vmatprep.subr.mxu0 0.0
    %268 = vmatpush1.msra.mxu0 %v238
    %269 = vmatprep.subr.mxu0 0.0
    %270 = vmatpush1.msra.mxu0 %v239
    %271 = vmatprep.subr.mxu0 0.0
    %272 = vmatpush1.msra.mxu0 %v240
    %273 = vmatprep.subr.mxu0 0.0
    %274 = vmatpush1.msra.mxu0 %v241
    %275 = vmatprep.subr.mxu0 0.0
    %276 = vmatpush1.msra.mxu0 %v242
    %277 = vmatprep.subr.mxu0 0.0
    %278 = vmatpush1.msra.mxu0 %v243
    %279 = vmatprep.subr.mxu0 0.0
    %280 = vmatpush1.msra.mxu0 %v244
    %281 = vmatprep.subr.mxu0 0.0
    %282 = vmatpush1.msra.mxu0 %v245
    %283 = vmatprep.subr.mxu0 0.0
    %284 = vmatpush1.msra.mxu0 %v246
    %285 = vmatprep.subr.mxu0 0.0
    %286 = vmatpush1.msra.mxu0 %v247
    %287 = vmatprep.subr.mxu0 0.0
    %288 = vmatpush1.msra.mxu0 %v248
    %289 = vmatprep.subr.mxu0 0.0
    %290 = vmatpush1.msra.mxu0 0.0
    %291 = vmatprep.subr.mxu0 0.0
    %292 = vmatpush1.msra.mxu0 0.0
    %293 = vmatprep.subr.mxu0 0.0
    %294 = vmatpush1.msra.mxu0 0.0
    %295 = vmatprep.subr.mxu0 0.0
    %296 = vmatpush1.msra.mxu0 0.0
    %297 = vmatprep.subr.mxu0 0.0
    %298 = vmatpush1.msra.mxu0 0.0
    %299 = vmatprep.subr.mxu0 0.0
    %300 = vmatpush1.msra.mxu0 0.0
    %301 = vmatprep.subr.mxu0 0.0
    %302 = vmatpush1.msra.mxu0 0.0
    %303 = vmatprep.subr.mxu0 0.0
    %304 = vmatpush1.msra.mxu0 0.0
    %305 = vmatprep.subr.mxu0 0.0
    %306 = vmatpush1.msra.mxu0 0.0
    %307 = vmatprep.subr.mxu0 0.0
    %308 = vmatpush1.msra.mxu0 0.0
    %309 = vmatprep.subr.mxu0 0.0
    %310 = vmatpush1.msra.mxu0 0.0
    %311 = vmatprep.subr.mxu0 0.0
    %312 = vmatpush1.msra.mxu0 0.0
    %313 = vmatprep.subr.mxu0 0.0
    %314 = vmatpush1.msra.mxu0 0.0
    %315 = vmatprep.subr.mxu0 0.0
    %316 = vmatpush1.msra.mxu0 0.0
    %317 = vmatprep.subr.mxu0 0.0
    %318 = vmatpush1.msra.mxu0 0.0
    %319 = vmatprep.subr.mxu0 0.0
    %320 = vmatpush1.msra.mxu0 0.0
    %321 = vmatprep.mubr.f32.mxu0 0.0
    %322 = vmatmul.mubr.f32.gmra.mrb[0].mxu0 %v231
    %v323 = vpop.f32.mrb[0].mxu0
    %v324 = vadd.f32 %v255, %v323
    %v325 = vpop.f32.mrb[0].mxu0
    %326 = vdwg.mxu0
    %v327 = vmax.f32 %v324, 0.0
    %s328 = scalar_lea.vmem [#allocation5], 384
    %v329 = vld [vmem:[%s328] sm:$0xff]
    %v330 = vld [vmem:[%s328 + $0x8] sm:$0xff]
    %v331 = vld [vmem:[%s328 + $0x10] sm:$0xff]
    %v332 = vld [vmem:[%s328 + $0x18] sm:$0xff]
    %v333 = vld [vmem:[%s328 + $0x20] sm:$0xff]
    %v334 = vld [vmem:[%s328 + $0x28] sm:$0xff]
    %v335 = vld [vmem:[%s328 + $0x30] sm:$0xff]
    %v336 = vld [vmem:[%s328 + $0x38] sm:$0xff]
    %v337 = vld [vmem:[%s328 + $0x40] sm:$0xff]
    %v338 = vld [vmem:[%s328 + $0x48] sm:$0xff]
    %v339 = vld [vmem:[%s328 + $0x50] sm:$0xff]
    %v340 = vld [vmem:[%s328 + $0x58] sm:$0xff]
    %v341 = vld [vmem:[%s328 + $0x60] sm:$0xff]
    %v342 = vld [vmem:[%s328 + $0x68] sm:$0xff]
    %v343 = vld [vmem:[%s328 + $0x70] sm:$0xff]
    %v344 = vld [vmem:[%s328 + $0x78] sm:$0xff]
    %s345 = scalar_lea.vmem %s2, 3
    %v346 = vld [vmem:[%s345] sm:$0x1]
    %v348 = vlaneseq
    %v349 = vshrl.u32 %v348, 7
    %v350 = vsub.s32 0, %v349
    %v351 = vrot.slane %v346, %v350
    %353 = vmatprep.subr.mxu0 0.0
    %354 = vmatpush1.msra.mxu0 %v329
    %355 = vmatprep.subr.mxu0 0.0
    %356 = vmatpush1.msra.mxu0 %v330
    %357 = vmatprep.subr.mxu0 0.0
    %358 = vmatpush1.msra.mxu0 %v331
    %359 = vmatprep.subr.mxu0 0.0
    %360 = vmatpush1.msra.mxu0 %v332
    %361 = vmatprep.subr.mxu0 0.0
    %362 = vmatpush1.msra.mxu0 %v333
    %363 = vmatprep.subr.mxu0 0.0
    %364 = vmatpush1.msra.mxu0 %v334
    %365 = vmatprep.subr.mxu0 0.0
    %366 = vmatpush1.msra.mxu0 %v335
    %367 = vmatprep.subr.mxu0 0.0
    %368 = vmatpush1.msra.mxu0 %v336
    %369 = vmatprep.subr.mxu0 0.0
    %370 = vmatpush1.msra.mxu0 %v337
    %371 = vmatprep.subr.mxu0 0.0
    %372 = vmatpush1.msra.mxu0 %v338
    %373 = vmatprep.subr.mxu0 0.0
    %374 = vmatpush1.msra.mxu0 %v339
    %375 = vmatprep.subr.mxu0 0.0
    %376 = vmatpush1.msra.mxu0 %v340
    %377 = vmatprep.subr.mxu0 0.0
    %378 = vmatpush1.msra.mxu0 %v341
    %379 = vmatprep.subr.mxu0 0.0
    %380 = vmatpush1.msra.mxu0 %v342
    %381 = vmatprep.subr.mxu0 0.0
    %382 = vmatpush1.msra.mxu0 %v343
    %383 = vmatprep.subr.mxu0 0.0
    %384 = vmatpush1.msra.mxu0 %v344
    %385 = vmatprep.subr.mxu0 0.0
    %386 = vmatpush1.msra.mxu0 0.0
    %387 = vmatprep.subr.mxu0 0.0
    %388 = vmatpush1.msra.mxu0 0.0
    %389 = vmatprep.subr.mxu0 0.0
    %390 = vmatpush1.msra.mxu0 0.0
    %391 = vmatprep.subr.mxu0 0.0
    %392 = vmatpush1.msra.mxu0 0.0
    %393 = vmatprep.subr.mxu0 0.0
    %394 = vmatpush1.msra.mxu0 0.0
    %395 = vmatprep.subr.mxu0 0.0
    %396 = vmatpush1.msra.mxu0 0.0
    %397 = vmatprep.subr.mxu0 0.0
    %398 = vmatpush1.msra.mxu0 0.0
    %399 = vmatprep.subr.mxu0 0.0
    %400 = vmatpush1.msra.mxu0 0.0
    %401 = vmatprep.subr.mxu0 0.0
    %402 = vmatpush1.msra.mxu0 0.0
    %403 = vmatprep.subr.mxu0 0.0
    %404 = vmatpush1.msra.mxu0 0.0
    %405 = vmatprep.subr.mxu0 0.0
    %406 = vmatpush1.msra.mxu0 0.0
    %407 = vmatprep.subr.mxu0 0.0
    %408 = vmatpush1.msra.mxu0 0.0
    %409 = vmatprep.subr.mxu0 0.0
    %410 = vmatpush1.msra.mxu0 0.0
    %411 = vmatprep.subr.mxu0 0.0
    %412 = vmatpush1.msra.mxu0 0.0
    %413 = vmatprep.subr.mxu0 0.0
    %414 = vmatpush1.msra.mxu0 0.0
    %415 = vmatprep.subr.mxu0 0.0
    %416 = vmatpush1.msra.mxu0 0.0
    %417 = vmatprep.mubr.f32.mxu0 0.0
    %418 = vmatmul.mubr.f32.gmra.mrb[0].mxu0 %v327
    %v419 = vpop.f32.mrb[0].mxu0
    %v420 = vadd.f32 %v351, %v419
    %v421 = vpop.f32.mrb[0].mxu0
    %422 = vdwg.mxu0
    %v423 = vmax.f32 %v420, 0.0
    %s424 = scalar_lea.vmem [#allocation5], 512
    %v425 = vld [vmem:[%s424] sm:$0xff]
    %v426 = vld [vmem:[%s424 + $0x8] sm:$0xff]
    %v427 = vld [vmem:[%s424 + $0x10] sm:$0xff]
    %v428 = vld [vmem:[%s424 + $0x18] sm:$0xff]
    %v429 = vld [vmem:[%s424 + $0x20] sm:$0xff]
    %v430 = vld [vmem:[%s424 + $0x28] sm:$0xff]
    %v431 = vld [vmem:[%s424 + $0x30] sm:$0xff]
    %v432 = vld [vmem:[%s424 + $0x38] sm:$0xff]
    %v433 = vld [vmem:[%s424 + $0x40] sm:$0xff]
    %v434 = vld [vmem:[%s424 + $0x48] sm:$0xff]
    %v435 = vld [vmem:[%s424 + $0x50] sm:$0xff]
    %v436 = vld [vmem:[%s424 + $0x58] sm:$0xff]
    %v437 = vld [vmem:[%s424 + $0x60] sm:$0xff]
    %v438 = vld [vmem:[%s424 + $0x68] sm:$0xff]
    %v439 = vld [vmem:[%s424 + $0x70] sm:$0xff]
    %v440 = vld [vmem:[%s424 + $0x78] sm:$0xff]
    %s441 = scalar_lea.vmem %s2, 4
    %v442 = vld [vmem:[%s441] sm:$0x1]
    %v444 = vlaneseq
    %v445 = vshrl.u32 %v444, 7
    %v446 = vsub.s32 0, %v445
    %v447 = vrot.slane %v442, %v446
    %449 = vmatprep.subr.mxu0 0.0
    %450 = vmatpush1.msra.mxu0 %v425
    %451 = vmatprep.subr.mxu0 0.0
    %452 = vmatpush1.msra.mxu0 %v426
    %453 = vmatprep.subr.mxu0 0.0
    %454 = vmatpush1.msra.mxu0 %v427
    %455 = vmatprep.subr.mxu0 0.0
    %456 = vmatpush1.msra.mxu0 %v428
    %457 = vmatprep.subr.mxu0 0.0
    %458 = vmatpush1.msra.mxu0 %v429
    %459 = vmatprep.subr.mxu0 0.0
    %460 = vmatpush1.msra.mxu0 %v430
    %461 = vmatprep.subr.mxu0 0.0
    %462 = vmatpush1.msra.mxu0 %v431
    %463 = vmatprep.subr.mxu0 0.0
    %464 = vmatpush1.msra.mxu0 %v432
    %465 = vmatprep.subr.mxu0 0.0
    %466 = vmatpush1.msra.mxu0 %v433
    %467 = vmatprep.subr.mxu0 0.0
    %468 = vmatpush1.msra.mxu0 %v434
    %469 = vmatprep.subr.mxu0 0.0
    %470 = vmatpush1.msra.mxu0 %v435
    %471 = vmatprep.subr.mxu0 0.0
    %472 = vmatpush1.msra.mxu0 %v436
    %473 = vmatprep.subr.mxu0 0.0
    %474 = vmatpush1.msra.mxu0 %v437
    %475 = vmatprep.subr.mxu0 0.0
    %476 = vmatpush1.msra.mxu0 %v438
    %477 = vmatprep.subr.mxu0 0.0
    %478 = vmatpush1.msra.mxu0 %v439
    %479 = vmatprep.subr.mxu0 0.0
    %480 = vmatpush1.msra.mxu0 %v440
    %481 = vmatprep.subr.mxu0 0.0
    %482 = vmatpush1.msra.mxu0 0.0
    %483 = vmatprep.subr.mxu0 0.0
    %484 = vmatpush1.msra.mxu0 0.0
    %485 = vmatprep.subr.mxu0 0.0
    %486 = vmatpush1.msra.mxu0 0.0
    %487 = vmatprep.subr.mxu0 0.0
    %488 = vmatpush1.msra.mxu0 0.0
    %489 = vmatprep.subr.mxu0 0.0
    %490 = vmatpush1.msra.mxu0 0.0
    %491 = vmatprep.subr.mxu0 0.0
    %492 = vmatpush1.msra.mxu0 0.0
    %493 = vmatprep.subr.mxu0 0.0
    %494 = vmatpush1.msra.mxu0 0.0
    %495 = vmatprep.subr.mxu0 0.0
    %496 = vmatpush1.msra.mxu0 0.0
    %497 = vmatprep.subr.mxu0 0.0
    %498 = vmatpush1.msra.mxu0 0.0
    %499 = vmatprep.subr.mxu0 0.0
    %500 = vmatpush1.msra.mxu0 0.0
    %501 = vmatprep.subr.mxu0 0.0
    %502 = vmatpush1.msra.mxu0 0.0
    %503 = vmatprep.subr.mxu0 0.0
    %504 = vmatpush1.msra.mxu0 0.0
    %505 = vmatprep.subr.mxu0 0.0
    %506 = vmatpush1.msra.mxu0 0.0
    %507 = vmatprep.subr.mxu0 0.0
    %508 = vmatpush1.msra.mxu0 0.0
    %509 = vmatprep.subr.mxu0 0.0
    %510 = vmatpush1.msra.mxu0 0.0
    %511 = vmatprep.subr.mxu0 0.0
    %512 = vmatpush1.msra.mxu0 0.0
    %513 = vmatprep.mubr.f32.mxu0 0.0
    %514 = vmatmul.mubr.f32.gmra.mrb[0].mxu0 %v423
    %v515 = vpop.f32.mrb[0].mxu0
    %v516 = vadd.f32 %v447, %v515
    %v517 = vpop.f32.mrb[0].mxu0
    %518 = vdwg.mxu0
    %519 = vst [vmem:[#allocation7] sm:$0xff] %v516
    // Predicated region
    $region22: #{tpu_custom_call.1} parent=1 // pred_check
      _
    $region23: #{tpu_custom_call.1} parent=1 // pred_check_branch
      %521 = sbr.rel (0) target = $region25
    $region24: #{tpu_custom_call.1} parent=1 // pred_region
      %s523 = ssub.s32 128, 128
      %524 = vsyncadd [#allocation4], %s523
      %s526 = sshll.u32 [#allocation7], 4
      %s527 = int_to_ptr.vmem [resolvable:$true] %s526
      %529 = dma.vmem_to_hbm [thread:$0]  %s527, 128, %s3, [#allocation4]
    $region25: #{tpu_custom_call.1} parent=1 // pred_fallthru
      _
    // Predicated region
    $region26: #{tpu_custom_call.1} parent=1 // pred_check
      _
    $region27: #{tpu_custom_call.1} parent=1 // pred_check_branch
      %531 = sbr.rel (0) target = $region29
    $region28: #{tpu_custom_call.1} parent=1 // pred_region
      %532 = dma.done [#allocation4], 128
    $region29: #{tpu_custom_call.1} parent=1 // pred_fallthru
      _
    %533 = vsyncpa [#allocation3], 1
    %534 = vsyncpa [#allocation6], 1
    %535 = vsyncpa [#allocation4], 1

</llo_original>
